<compile_context>
chip_gen: v7x
topology: tpu7x:2x2x1
jax: 0.10.0
libtpu: 0.0.40
codegen_flags: <defaults>
</compile_context>

<pallas_src>
import jax
import jax.numpy as jnp
from jax.experimental import pallas as pl
from jax.experimental.pallas import tpu as pltpu


def _round_up(x, m):
    return (x + m - 1) // m * m


# ---------------------------------------------------------------------------
# Pallas kernel: fused class_mlp (matmul+ReLU, matmul+ReLU) + fc-folded matvec.
# Tokens (M = B*N) live on sublanes; one [TM, 1] logit column per grid step.
# ---------------------------------------------------------------------------
def _lam_head_kernel(x_ref, w1_ref, b1_ref, w2_ref, b2_ref, w3fc_ref, out_ref):
    # x_ref:    [TM, D_in] f32   class-embedding tile (pipelined)
    # w1_ref:   [D_in, H]  f32   resident    b1_ref: [1, H] f32
    # w2_ref:   [H, H]     f32   resident    b2_ref: [1, H] f32
    # w3fc_ref: [H, 1]     f32   w3 @ fc_weight (fc folded into layer 3)
    # out_ref:  [TM, 1]    f32   per-token logit (b3 . fc added in wrapper)
    h1 = jnp.dot(x_ref[...], w1_ref[...], preferred_element_type=jnp.float32)
    h1 = jnp.maximum(h1 + b1_ref[...], 0.0)
    h2 = jnp.dot(h1, w2_ref[...], preferred_element_type=jnp.float32)
    h2 = jnp.maximum(h2 + b2_ref[...], 0.0)
    out_ref[...] = jnp.dot(h2, w3fc_ref[...], preferred_element_type=jnp.float32)


def _choose_tile_m(M):
    # Small M: one block covering the whole token axis (block dims == array
    # dims, so the (8,128) rule is trivially satisfied).
    if M <= 64:
        return M
    # Otherwise: near-even tiles, multiple of 8, <= ~1024 rows, and an EVEN
    # number of tiles >= 2 so the "parallel" axis shards over v7x's two
    # TensorCores and the ragged last tile wastes < 8 rows of MXU work (v5e).
    n_tiles = max(2, pl.cdiv(M, 1024))
    if n_tiles % 2:
        n_tiles += 1
    return _round_up(pl.cdiv(M, n_tiles), 8)


# ---------------------------------------------------------------------------
# prepare()-time parameter packing (runs ONCE per prepare(), not per step).
# Weights are in [in, out] layout (PyTorch nn.Linear weights transposed);
# fc_weight is the [D_out] feature vector installed by prepare().
# ---------------------------------------------------------------------------
def prepare_head_params(w1, b1, w2, b2, w3, b3, fc_weight):
    f32 = jnp.float32
    H = w1.shape[1]
    w3fc = (w3.astype(f32) @ fc_weight.astype(f32)).reshape(H, 1)   # [H, 1]
    b3fc = jnp.dot(b3.astype(f32), fc_weight.astype(f32))           # scalar
    return (w1.astype(f32), b1.reshape(1, -1).astype(f32),
            w2.astype(f32), b2.reshape(1, -1).astype(f32),
            w3fc.astype(f32), b3fc.astype(f32))


@jax.jit
def lam_explainer_head(class_embeddings, w1, b1, w2, b2, w3fc, b3fc):
    """class_embeddings: [B, N, D_in] -> [B, N] (one logit per class token)."""
    B, N, D_in = class_embeddings.shape
    M = B * N
    TM = _choose_tile_m(M)
    grid_m = pl.cdiv(M, TM)

    x = class_embeddings.reshape(M, D_in)          # metadata-only reshape, no HBM pass
    resident = lambda shape: pl.BlockSpec(shape, lambda i: (0,) * len(shape))

    out = pl.pallas_call(
        _lam_head_kernel,
        out_shape=jax.ShapeDtypeStruct((M, 1), jnp.float32),
        grid=(grid_m,),
        in_specs=[
            pl.BlockSpec((TM, D_in), lambda i: (i, 0)),    # activation tile (pipelined)
            resident((D_in, w1.shape[1])),                 # w1  (VMEM-resident)
            resident((1, w1.shape[1])),                    # b1
            resident((w2.shape[0], w2.shape[1])),          # w2
            resident((1, w2.shape[1])),                    # b2
            resident((w3fc.shape[0], 1)),                  # w3 @ fc
        ],
        out_specs=pl.BlockSpec((TM, 1), lambda i: (i, 0)),
        compiler_params=pltpu.CompilerParams(
            dimension_semantics=("parallel",)),            # independent token tiles
    )(x, w1, b1, w2, b2, w3fc)

    # b3 . fc is a single scalar; adding it here fuses with the reshape.
    return out[:, 0].reshape(B, N) + b3fc


# ---------------------------------------------------------------------------
# Glue mirroring LamExplainer.prepare(): extract the feature vector at (x, y)
# from the (already up-scaled / spatially-convolved) query feature map and use
# it as the fc weight.  Plain indexing — no kernel needed.
# ---------------------------------------------------------------------------
def prepare_fc_weight(query_feat_map_nchw, coord, query_img_hw):
    # query_feat_map_nchw: [1, D_out, Hf, Wf]  (NCHW, as in PyTorch)
    x, y = coord
    img_h, img_w = query_img_hw
    _, _, hf, wf = query_feat_map_nchw.shape
    xi = int(x * (wf / img_w))
    yi = int(y * (hf / img_h))
    return query_feat_map_nchw[0, :, xi, yi]  # [D_out]


# ---------------------------------------------------------------------------
# Reference (exact f32 semantics of the original module, unfolded fc).
# ---------------------------------------------------------------------------
def _reference_head_f32(class_embeddings, w1, b1, w2, b2, w3, b3, fc_weight):
    x = class_embeddings.astype(jnp.float32)
    h1 = jax.nn.relu(x @ w1 + b1)
    h2 = jax.nn.relu(h1 @ w2 + b2)
    h3 = h2 @ w3 + b3
    return jnp.einsum("bnd,d->bn", h3, fc_weight)


if __name__ == "__main__":
    key = jax.random.PRNGKey(0)
    ks = jax.random.split(key, 8)

    # Small, forward-consistent shapes.
    B = 2          # batch
    N = 8          # class tokens
    D_in = 32      # transformer / class-embedding dim
    H = 32         # class_mlp hidden dim
    D_out = 16     # class_mlp output dim == channels of upscaled feature map
    Hf = Wf = 16   # query feature-map spatial size
    IMG = 64       # query image spatial size

    # Post-transformer class embeddings (the kernel's real input).
    class_embeddings = jax.random.normal(ks[0], (B, N, D_in), dtype=jnp.float32)

    # class_mlp parameters (deterministic synthetic init; [in, out] layout).
    w1 = jax.random.normal(ks[1], (D_in, H), dtype=jnp.float32) * 0.1
    b1 = jax.random.normal(ks[2], (H,), dtype=jnp.float32) * 0.01
    w2 = jax.random.normal(ks[3], (H, H), dtype=jnp.float32) * 0.1
    b2 = jax.random.normal(ks[4], (H,), dtype=jnp.float32) * 0.01
    w3 = jax.random.normal(ks[5], (H, D_out), dtype=jnp.float32) * 0.1
    b3 = jax.random.normal(ks[6], (D_out,), dtype=jnp.float32) * 0.01

    # prepare(): synthetic up-scaled/spatially-convolved query feature map, NCHW.
    query_feat_map = jax.random.normal(ks[7], (1, D_out, Hf, Wf), dtype=jnp.float32)
    fc_weight = prepare_fc_weight(query_feat_map, coord=(20, 37), query_img_hw=(IMG, IMG))

    # prepare()-time packing (fc fold etc.) — done once, outside the per-step path.
    head_params = prepare_head_params(w1, b1, w2, b2, w3, b3, fc_weight)

    out = lam_explainer_head(class_embeddings, *head_params)
    out = jax.block_until_ready(out)
    assert out.shape == (B, N)

    ref = _reference_head_f32(class_embeddings, w1, b1, w2, b2, w3, b3, fc_weight)
    assert jnp.allclose(out, ref, atol=1e-3, rtol=1e-3), (out, ref)

    print("KERNEL_OK")
</pallas_src>

<mosaic_0001>
module attributes {stable_mosaic.version = 11 : i64} {
  func.func @_lam_head_kernel(%arg0: i32, %arg1: memref<16x32xf32, #tpu.memory_space<vmem>>, %arg2: memref<32x32xf32, #tpu.memory_space<vmem>>, %arg3: memref<1x32xf32, #tpu.memory_space<vmem>>, %arg4: memref<32x32xf32, #tpu.memory_space<vmem>>, %arg5: memref<1x32xf32, #tpu.memory_space<vmem>>, %arg6: memref<32x1xf32, #tpu.memory_space<vmem>>, %arg7: memref<16x1xf32, #tpu.memory_space<vmem>>) attributes {dimension_semantics = [#tpu.dimension_semantics<parallel>], iteration_bounds = array<i64: 1>, scalar_prefetch = 0 : i64, scratch_operands = 0 : i64, tpu.core_type = #tpu.core_type<tc>, window_params = [{transform_indices = @transform_0, window_bounds = array<i64: 16, 32>}, {pipeline_mode = #tpu.pipeline_mode<synchronous>, transform_indices = @transform_1, window_bounds = array<i64: 32, 32>}, {pipeline_mode = #tpu.pipeline_mode<synchronous>, transform_indices = @transform_2, window_bounds = array<i64: 1, 32>}, {pipeline_mode = #tpu.pipeline_mode<synchronous>, transform_indices = @transform_3, window_bounds = array<i64: 32, 32>}, {pipeline_mode = #tpu.pipeline_mode<synchronous>, transform_indices = @transform_4, window_bounds = array<i64: 1, 32>}, {pipeline_mode = #tpu.pipeline_mode<synchronous>, transform_indices = @transform_5, window_bounds = array<i64: 32, 1>}, {transform_indices = @transform_6, window_bounds = array<i64: 16, 1>}]} {
    %c0 = arith.constant 0 : index
    %c0_0 = arith.constant 0 : index
    %0 = vector.load %arg1[%c0, %c0_0] : memref<16x32xf32, #tpu.memory_space<vmem>>, vector<16x32xf32>
    %c0_1 = arith.constant 0 : index
    %c0_2 = arith.constant 0 : index
    %1 = vector.load %arg2[%c0_1, %c0_2] : memref<32x32xf32, #tpu.memory_space<vmem>>, vector<32x32xf32>
    %cst = arith.constant dense<0.000000e+00> : vector<16x32xf32>
    %2 = tpu.matmul %0, %1, %cst {dimension_numbers = #tpu.dot_dimension_numbers<[1], [0], [0], [1], [0, 0, 1, 1], [], []>} : vector<16x32xf32>, vector<32x32xf32>, vector<16x32xf32> -> vector<16x32xf32>
    %c0_3 = arith.constant 0 : index
    %c0_4 = arith.constant 0 : index
    %3 = vector.load %arg3[%c0_3, %c0_4] : memref<1x32xf32, #tpu.memory_space<vmem>>, vector<1x32xf32>
    %4 = vector.broadcast %3 : vector<1x32xf32> to vector<16x32xf32>
    %5 = arith.addf %2, %4 : vector<16x32xf32>
    %cst_5 = arith.constant 0.000000e+00 : f32
    %6 = vector.broadcast %cst_5 : f32 to vector<16x32xf32>
    %7 = arith.maximumf %5, %6 : vector<16x32xf32>
    %c0_6 = arith.constant 0 : index
    %c0_7 = arith.constant 0 : index
    %8 = vector.load %arg4[%c0_6, %c0_7] : memref<32x32xf32, #tpu.memory_space<vmem>>, vector<32x32xf32>
    %cst_8 = arith.constant dense<0.000000e+00> : vector<16x32xf32>
    %9 = tpu.matmul %7, %8, %cst_8 {dimension_numbers = #tpu.dot_dimension_numbers<[1], [0], [0], [1], [0, 0, 1, 1], [], []>} : vector<16x32xf32>, vector<32x32xf32>, vector<16x32xf32> -> vector<16x32xf32>
    %c0_9 = arith.constant 0 : index
    %c0_10 = arith.constant 0 : index
    %10 = vector.load %arg5[%c0_9, %c0_10] : memref<1x32xf32, #tpu.memory_space<vmem>>, vector<1x32xf32>
    %11 = vector.broadcast %10 : vector<1x32xf32> to vector<16x32xf32>
    %12 = arith.addf %9, %11 : vector<16x32xf32>
    %cst_11 = arith.constant 0.000000e+00 : f32
    %13 = vector.broadcast %cst_11 : f32 to vector<16x32xf32>
    %14 = arith.maximumf %12, %13 : vector<16x32xf32>
    %c0_12 = arith.constant 0 : index
    %c0_13 = arith.constant 0 : index
    %15 = vector.load %arg6[%c0_12, %c0_13] : memref<32x1xf32, #tpu.memory_space<vmem>>, vector<32x1xf32>
    %cst_14 = arith.constant dense<0.000000e+00> : vector<16x1xf32>
    %16 = tpu.matmul %14, %15, %cst_14 {dimension_numbers = #tpu.dot_dimension_numbers<[1], [0], [0], [1], [0, 0, 1, 1], [], []>} : vector<16x32xf32>, vector<32x1xf32>, vector<16x1xf32> -> vector<16x1xf32>
    %c0_15 = arith.constant 0 : index
    %c0_16 = arith.constant 0 : index
    %17 = vector.load %arg7[%c0_15, %c0_16] : memref<16x1xf32, #tpu.memory_space<vmem>>, vector<16x1xf32>
    tpu.vector_store %arg7[%c0_15, %c0_16], %16 {strides = array<i32>} : memref<16x1xf32, #tpu.memory_space<vmem>>, vector<16x1xf32>,
    return
  }
  func.func @transform_0(%arg0: i32) -> (i32, i32) {
    %c0_i32 = arith.constant 0 : i32
    %c0_i32_0 = arith.constant 0 : i32
    return %arg0, %c0_i32 : i32, i32
  }
  func.func @transform_1(%arg0: i32) -> (i32, i32) {
    %c0_i32 = arith.constant 0 : i32
    %c0_i32_0 = arith.constant 0 : i32
    %c0_i32_1 = arith.constant 0 : i32
    return %c0_i32, %c0_i32_0 : i32, i32
  }
  func.func @transform_2(%arg0: i32) -> (i32, i32) {
    %c0_i32 = arith.constant 0 : i32
    %c0_i32_0 = arith.constant 0 : i32
    %c0_i32_1 = arith.constant 0 : i32
    return %c0_i32, %c0_i32_0 : i32, i32
  }
  func.func @transform_3(%arg0: i32) -> (i32, i32) {
    %c0_i32 = arith.constant 0 : i32
    %c0_i32_0 = arith.constant 0 : i32
    %c0_i32_1 = arith.constant 0 : i32
    return %c0_i32, %c0_i32_0 : i32, i32
  }
  func.func @transform_4(%arg0: i32) -> (i32, i32) {
    %c0_i32 = arith.constant 0 : i32
    %c0_i32_0 = arith.constant 0 : i32
    %c0_i32_1 = arith.constant 0 : i32
    return %c0_i32, %c0_i32_0 : i32, i32
  }
  func.func @transform_5(%arg0: i32) -> (i32, i32) {
    %c0_i32 = arith.constant 0 : i32
    %c0_i32_0 = arith.constant 0 : i32
    %c0_i32_1 = arith.constant 0 : i32
    return %c0_i32, %c0_i32_0 : i32, i32
  }
  func.func @transform_6(%arg0: i32) -> (i32, i32) {
    %c0_i32 = arith.constant 0 : i32
    %c0_i32_0 = arith.constant 0 : i32
    return %arg0, %c0_i32 : i32, i32
  }
}

</mosaic_0001>

<llo_original>
// kernel: lam_explainer_head.1
$region0: #{lam_explainer_head.1}
  #allocation0 [shape = 'u32[]', space=smem, size = 0x4, offset = 0x4, fixed_abs, tag = 'smem constant byte address 0x4 - core index']
  #allocation1 [shape = 'u32[144,128]{1,0:T(1,128)}', space=vmem, size = 0x12000, scoped, tag = 'internal scratch']
  %s0 = inlined_call_operand.vmem [shape: f32[16,32], index: 0, kind: input, shape index: {}]
  %s1 = inlined_call_operand.vmem [shape: f32[32,32], index: 1, kind: input, shape index: {}]
  %s2 = inlined_call_operand.vmem [shape: f32[1,32], index: 2, kind: input, shape index: {}]
  %s3 = inlined_call_operand.hbm [shape: f32[32,32], index: 3, kind: input, shape index: {}]
  %s4 = inlined_call_operand.vmem [shape: f32[1,32], index: 4, kind: input, shape index: {}]
  %s5 = inlined_call_operand.vmem [shape: f32[32,1], index: 5, kind: input, shape index: {}]
  %s6 = inlined_call_operand.vmem [shape: f32[16,1], index: 6, kind: output, shape index: {}]
  %s7 = sld [smem:[#allocation0]]
  $region38: #{lam_explainer_head.1} parent=0
    _
  %s9 = ssub.s32 1, %s7
  %s10 = scalar_select 0, %s9, %s7
  $region1: #{lam_explainer_head.1} parent=0
    #allocation2 [shape = 'u8[16384]{0}', space=vmem, size = 0x4000, scoped, tag = 'input window, operand 3, single buffered']
    #allocation3 [shape = 's32[1]{0}', space=sflag, size = 0x4, scoped, tag = 'scoped memory for lam_explainer_head.1']
    %11 = vsyncpa [#allocation3], 0
    // Predicated region
    $region2: #{lam_explainer_head.1} parent=1 // pred_check
      _
    $region3: #{lam_explainer_head.1} parent=1 // pred_check_branch
      %13 = sbr.rel (0) target = $region5
    $region4: #{lam_explainer_head.1} parent=1 // pred_region
      _
    $region5: #{lam_explainer_head.1} parent=1 // pred_fallthru
      _
    // Predicated region
    $region6: #{lam_explainer_head.1} parent=1 // pred_check
      _
    $region7: #{lam_explainer_head.1} parent=1 // pred_check_branch
      %15 = sbr.rel (0) target = $region9
    $region8: #{lam_explainer_head.1} parent=1 // pred_region
      _
    $region9: #{lam_explainer_head.1} parent=1 // pred_fallthru
      _
    // Predicated region
    $region10: #{lam_explainer_head.1} parent=1 // pred_check
      _
    $region11: #{lam_explainer_head.1} parent=1 // pred_check_branch
      %17 = sbr.rel (0) target = $region13
    $region12: #{lam_explainer_head.1} parent=1 // pred_region
      _
    $region13: #{lam_explainer_head.1} parent=1 // pred_fallthru
      _
    // Predicated region
    $region14: #{lam_explainer_head.1} parent=1 // pred_check
      _
    $region15: #{lam_explainer_head.1} parent=1 // pred_check_branch
      %19 = sbr.rel (0) target = $region17
    $region16: #{lam_explainer_head.1} parent=1 // pred_region
      %s21 = ssub.s32 512, 512
      %22 = vsyncadd [#allocation3], %s21
      %s23 = sshll.u32 [#allocation2], 4
      %s24 = int_to_ptr.vmem [resolvable:$true] %s23
      %29 = dma.hbm_to_vmem [thread:$0]  %s3, 512, %s24, [#allocation3], 128, 128, 8
    $region17: #{lam_explainer_head.1} parent=1 // pred_fallthru
      _
    // Predicated region
    $region18: #{lam_explainer_head.1} parent=1 // pred_check
      _
    $region19: #{lam_explainer_head.1} parent=1 // pred_check_branch
      %31 = sbr.rel (0) target = $region21
    $region20: #{lam_explainer_head.1} parent=1 // pred_region
      _
    $region21: #{lam_explainer_head.1} parent=1 // pred_fallthru
      _
    // Predicated region
    $region22: #{lam_explainer_head.1} parent=1 // pred_check
      _
    $region23: #{lam_explainer_head.1} parent=1 // pred_check_branch
      %33 = sbr.rel (0) target = $region25
    $region24: #{lam_explainer_head.1} parent=1 // pred_region
      _
    $region25: #{lam_explainer_head.1} parent=1 // pred_fallthru
      _
    // Predicated region
    $region26: #{lam_explainer_head.1} parent=1 // pred_check
      _
    $region27: #{lam_explainer_head.1} parent=1 // pred_check_branch
      %35 = sbr.rel (0) target = $region29
    $region28: #{lam_explainer_head.1} parent=1 // pred_region
      %36 = dma.done [#allocation3], 512
    $region29: #{lam_explainer_head.1} parent=1 // pred_fallthru
      _
    %v37 = vld [vmem:[%s0] sm:$0xff]
    %v38 = vld [vmem:[%s0 + $0x8] sm:$0xff]
    %v39 = vld [vmem:[%s1] sm:$0xff]
    %v40 = vld [vmem:[%s1 + $0x8] sm:$0xff]
    %v41 = vld [vmem:[%s1 + $0x10] sm:$0xff]
    %v42 = vld [vmem:[%s1 + $0x18] sm:$0xff]
    %v43 = vld [vmem:[%s2] sm:$0x1]
    %v45 = vlaneseq
    %v46 = vshrl.u32 %v45, 7
    %v47 = vsub.s32 0, %v46
    %v48 = vrot.slane %v43, %v47
    %vm50 = vcmask 261120
    %v52 = vsel %vm50, %v37, 0
    %v55 = vsel %vm50, %v38, 0
    %57 = vmatprep.subr.mxu0 0.0
    %58 = vmatpush1.msra.mxu0 %v39
    %59 = vmatprep.subr.mxu0 0.0
    %60 = vmatpush1.msra.mxu0 %v40
    %61 = vmatprep.subr.mxu0 0.0
    %62 = vmatpush1.msra.mxu0 %v41
    %63 = vmatprep.subr.mxu0 0.0
    %64 = vmatpush1.msra.mxu0 %v42
    %65 = vmatprep.subr.mxu0 0.0
    %66 = vmatpush1.msra.mxu0 0.0
    %67 = vmatprep.subr.mxu0 0.0
    %68 = vmatpush1.msra.mxu0 0.0
    %69 = vmatprep.subr.mxu0 0.0
    %70 = vmatpush1.msra.mxu0 0.0
    %71 = vmatprep.subr.mxu0 0.0
    %72 = vmatpush1.msra.mxu0 0.0
    %73 = vmatprep.subr.mxu0 0.0
    %74 = vmatpush1.msra.mxu0 0.0
    %75 = vmatprep.subr.mxu0 0.0
    %76 = vmatpush1.msra.mxu0 0.0
    %77 = vmatprep.subr.mxu0 0.0
    %78 = vmatpush1.msra.mxu0 0.0
    %79 = vmatprep.subr.mxu0 0.0
    %80 = vmatpush1.msra.mxu0 0.0
    %81 = vmatprep.subr.mxu0 0.0
    %82 = vmatpush1.msra.mxu0 0.0
    %83 = vmatprep.subr.mxu0 0.0
    %84 = vmatpush1.msra.mxu0 0.0
    %85 = vmatprep.subr.mxu0 0.0
    %86 = vmatpush1.msra.mxu0 0.0
    %87 = vmatprep.subr.mxu0 0.0
    %88 = vmatpush1.msra.mxu0 0.0
    %89 = vmatprep.subr.mxu0 0.0
    %90 = vmatpush1.msra.mxu0 0.0
    %91 = vmatprep.subr.mxu0 0.0
    %92 = vmatpush1.msra.mxu0 0.0
    %93 = vmatprep.subr.mxu0 0.0
    %94 = vmatpush1.msra.mxu0 0.0
    %95 = vmatprep.subr.mxu0 0.0
    %96 = vmatpush1.msra.mxu0 0.0
    %97 = vmatprep.subr.mxu0 0.0
    %98 = vmatpush1.msra.mxu0 0.0
    %99 = vmatprep.subr.mxu0 0.0
    %100 = vmatpush1.msra.mxu0 0.0
    %101 = vmatprep.subr.mxu0 0.0
    %102 = vmatpush1.msra.mxu0 0.0
    %103 = vmatprep.subr.mxu0 0.0
    %104 = vmatpush1.msra.mxu0 0.0
    %105 = vmatprep.subr.mxu0 0.0
    %106 = vmatpush1.msra.mxu0 0.0
    %107 = vmatprep.subr.mxu0 0.0
    %108 = vmatpush1.msra.mxu0 0.0
    %109 = vmatprep.subr.mxu0 0.0
    %110 = vmatpush1.msra.mxu0 0.0
    %111 = vmatprep.subr.mxu0 0.0
    %112 = vmatpush1.msra.mxu0 0.0
    %113 = vmatprep.subr.mxu0 0.0
    %114 = vmatpush1.msra.mxu0 0.0
    %115 = vmatprep.subr.mxu0 0.0
    %116 = vmatpush1.msra.mxu0 0.0
    %117 = vmatprep.subr.mxu0 0.0
    %118 = vmatpush1.msra.mxu0 0.0
    %119 = vmatprep.subr.mxu0 0.0
    %120 = vmatpush1.msra.mxu0 0.0
    %121 = vmatprep.mubr.f32.mxu0 0.0
    %122 = vmatmul.mubr.f32.gmra.mrb[0].mxu0 %v52
    %v123 = vpop.f32.mrb[0].mxu0
    %v124 = vadd.f32 %v48, %v123
    %v125 = vpop.f32.mrb[0].mxu0
    %126 = vmatprep.mubr.f32.mxu0 0.0
    %127 = vmatmul.mubr.f32.gmra.mrb[0].mxu0 %v55
    %v128 = vpop.f32.mrb[0].mxu0
    %v129 = vadd.f32 %v48, %v128
    %v130 = vpop.f32.mrb[0].mxu0
    %131 = vdwg.mxu0
    %v132 = vmax.f32 %v124, 0.0
    %v133 = vmax.f32 %v129, 0.0
    %v134 = vld [vmem:[#allocation2] sm:$0xff]
    %v135 = vld [vmem:[#allocation2 + $0x8] sm:$0xff]
    %v136 = vld [vmem:[#allocation2 + $0x10] sm:$0xff]
    %v137 = vld [vmem:[#allocation2 + $0x18] sm:$0xff]
    %v138 = vld [vmem:[%s4] sm:$0x1]
    %v140 = vlaneseq
    %v141 = vshrl.u32 %v140, 7
    %v142 = vsub.s32 0, %v141
    %v143 = vrot.slane %v138, %v142
    %v146 = vsel %vm50, %v132, 0
    %v149 = vsel %vm50, %v133, 0
    %151 = vmatprep.subr.mxu0 0.0
    %152 = vmatpush1.msra.mxu0 %v134
    %153 = vmatprep.subr.mxu0 0.0
    %154 = vmatpush1.msra.mxu0 %v135
    %155 = vmatprep.subr.mxu0 0.0
    %156 = vmatpush1.msra.mxu0 %v136
    %157 = vmatprep.subr.mxu0 0.0
    %158 = vmatpush1.msra.mxu0 %v137
    %159 = vmatprep.subr.mxu0 0.0
    %160 = vmatpush1.msra.mxu0 0.0
    %161 = vmatprep.subr.mxu0 0.0
    %162 = vmatpush1.msra.mxu0 0.0
    %163 = vmatprep.subr.mxu0 0.0
    %164 = vmatpush1.msra.mxu0 0.0
    %165 = vmatprep.subr.mxu0 0.0
    %166 = vmatpush1.msra.mxu0 0.0
    %167 = vmatprep.subr.mxu0 0.0
    %168 = vmatpush1.msra.mxu0 0.0
    %169 = vmatprep.subr.mxu0 0.0
    %170 = vmatpush1.msra.mxu0 0.0
    %171 = vmatprep.subr.mxu0 0.0
    %172 = vmatpush1.msra.mxu0 0.0
    %173 = vmatprep.subr.mxu0 0.0
    %174 = vmatpush1.msra.mxu0 0.0
    %175 = vmatprep.subr.mxu0 0.0
    %176 = vmatpush1.msra.mxu0 0.0
    %177 = vmatprep.subr.mxu0 0.0
    %178 = vmatpush1.msra.mxu0 0.0
    %179 = vmatprep.subr.mxu0 0.0
    %180 = vmatpush1.msra.mxu0 0.0
    %181 = vmatprep.subr.mxu0 0.0
    %182 = vmatpush1.msra.mxu0 0.0
    %183 = vmatprep.subr.mxu0 0.0
    %184 = vmatpush1.msra.mxu0 0.0
    %185 = vmatprep.subr.mxu0 0.0
    %186 = vmatpush1.msra.mxu0 0.0
    %187 = vmatprep.subr.mxu0 0.0
    %188 = vmatpush1.msra.mxu0 0.0
    %189 = vmatprep.subr.mxu0 0.0
    %190 = vmatpush1.msra.mxu0 0.0
    %191 = vmatprep.subr.mxu0 0.0
    %192 = vmatpush1.msra.mxu0 0.0
    %193 = vmatprep.subr.mxu0 0.0
    %194 = vmatpush1.msra.mxu0 0.0
    %195 = vmatprep.subr.mxu0 0.0
    %196 = vmatpush1.msra.mxu0 0.0
    %197 = vmatprep.subr.mxu0 0.0
    %198 = vmatpush1.msra.mxu0 0.0
    %199 = vmatprep.subr.mxu0 0.0
    %200 = vmatpush1.msra.mxu0 0.0
    %201 = vmatprep.subr.mxu0 0.0
    %202 = vmatpush1.msra.mxu0 0.0
    %203 = vmatprep.subr.mxu0 0.0
    %204 = vmatpush1.msra.mxu0 0.0
    %205 = vmatprep.subr.mxu0 0.0
    %206 = vmatpush1.msra.mxu0 0.0
    %207 = vmatprep.subr.mxu0 0.0
    %208 = vmatpush1.msra.mxu0 0.0
    %209 = vmatprep.subr.mxu0 0.0
    %210 = vmatpush1.msra.mxu0 0.0
    %211 = vmatprep.subr.mxu0 0.0
    %212 = vmatpush1.msra.mxu0 0.0
    %213 = vmatprep.subr.mxu0 0.0
    %214 = vmatpush1.msra.mxu0 0.0
    %215 = vmatprep.mubr.f32.mxu0 0.0
    %216 = vmatmul.mubr.f32.gmra.mrb[0].mxu0 %v146
    %v217 = vpop.f32.mrb[0].mxu0
    %v218 = vadd.f32 %v143, %v217
    %v219 = vpop.f32.mrb[0].mxu0
    %220 = vmatprep.mubr.f32.mxu0 0.0
    %221 = vmatmul.mubr.f32.gmra.mrb[0].mxu0 %v149
    %v222 = vpop.f32.mrb[0].mxu0
    %v223 = vadd.f32 %v143, %v222
    %v224 = vpop.f32.mrb[0].mxu0
    %225 = vdwg.mxu0
    %v226 = vmax.f32 %v218, 0.0
    %v227 = vmax.f32 %v223, 0.0
    %v228 = vld [vmem:[%s5] sm:$0xff]
    %v229 = vld [vmem:[%s5 + $0x8] sm:$0xff]
    %v230 = vld [vmem:[%s5 + $0x10] sm:$0xff]
    %v231 = vld [vmem:[%s5 + $0x18] sm:$0xff]
    %v233 = vsel %vm50, %v226, 0
    %v236 = vsel %vm50, %v227, 0
    %238 = vmatprep.subr.mxu0 0.0
    %239 = vmatpush1.msra.mxu0 %v228
    %240 = vmatprep.subr.mxu0 0.0
    %241 = vmatpush1.msra.mxu0 %v229
    %242 = vmatprep.subr.mxu0 0.0
    %243 = vmatpush1.msra.mxu0 %v230
    %244 = vmatprep.subr.mxu0 0.0
    %245 = vmatpush1.msra.mxu0 %v231
    %246 = vmatprep.subr.mxu0 0.0
    %247 = vmatpush1.msra.mxu0 0.0
    %248 = vmatprep.subr.mxu0 0.0
    %249 = vmatpush1.msra.mxu0 0.0
    %250 = vmatprep.subr.mxu0 0.0
    %251 = vmatpush1.msra.mxu0 0.0
    %252 = vmatprep.subr.mxu0 0.0
    %253 = vmatpush1.msra.mxu0 0.0
    %254 = vmatprep.subr.mxu0 0.0
    %255 = vmatpush1.msra.mxu0 0.0
    %256 = vmatprep.subr.mxu0 0.0
    %257 = vmatpush1.msra.mxu0 0.0
    %258 = vmatprep.subr.mxu0 0.0
    %259 = vmatpush1.msra.mxu0 0.0
    %260 = vmatprep.subr.mxu0 0.0
    %261 = vmatpush1.msra.mxu0 0.0
    %262 = vmatprep.subr.mxu0 0.0
    %263 = vmatpush1.msra.mxu0 0.0
    %264 = vmatprep.subr.mxu0 0.0
    %265 = vmatpush1.msra.mxu0 0.0
    %266 = vmatprep.subr.mxu0 0.0
    %267 = vmatpush1.msra.mxu0 0.0
    %268 = vmatprep.subr.mxu0 0.0
    %269 = vmatpush1.msra.mxu0 0.0
    %270 = vmatprep.subr.mxu0 0.0
    %271 = vmatpush1.msra.mxu0 0.0
    %272 = vmatprep.subr.mxu0 0.0
    %273 = vmatpush1.msra.mxu0 0.0
    %274 = vmatprep.subr.mxu0 0.0
    %275 = vmatpush1.msra.mxu0 0.0
    %276 = vmatprep.subr.mxu0 0.0
    %277 = vmatpush1.msra.mxu0 0.0
    %278 = vmatprep.subr.mxu0 0.0
    %279 = vmatpush1.msra.mxu0 0.0
    %280 = vmatprep.subr.mxu0 0.0
    %281 = vmatpush1.msra.mxu0 0.0
    %282 = vmatprep.subr.mxu0 0.0
    %283 = vmatpush1.msra.mxu0 0.0
    %284 = vmatprep.subr.mxu0 0.0
    %285 = vmatpush1.msra.mxu0 0.0
    %286 = vmatprep.subr.mxu0 0.0
    %287 = vmatpush1.msra.mxu0 0.0
    %288 = vmatprep.subr.mxu0 0.0
    %289 = vmatpush1.msra.mxu0 0.0
    %290 = vmatprep.subr.mxu0 0.0
    %291 = vmatpush1.msra.mxu0 0.0
    %292 = vmatprep.subr.mxu0 0.0
    %293 = vmatpush1.msra.mxu0 0.0
    %294 = vmatprep.subr.mxu0 0.0
    %295 = vmatpush1.msra.mxu0 0.0
    %296 = vmatprep.subr.mxu0 0.0
    %297 = vmatpush1.msra.mxu0 0.0
    %298 = vmatprep.subr.mxu0 0.0
    %299 = vmatpush1.msra.mxu0 0.0
    %300 = vmatprep.subr.mxu0 0.0
    %301 = vmatpush1.msra.mxu0 0.0
    %302 = vmatprep.mubr.f32.mxu0 0.0
    %303 = vmatmul.mubr.f32.gmra.mrb[0].mxu0 %v233
    %v304 = vpop.f32.mrb[0].mxu0
    %v305 = vadd.f32 0.0, %v304
    %v306 = vpop.f32.mrb[0].mxu0
    %307 = vmatprep.mubr.f32.mxu0 0.0
    %308 = vmatmul.mubr.f32.gmra.mrb[0].mxu0 %v236
    %v309 = vpop.f32.mrb[0].mxu0
    %v310 = vadd.f32 0.0, %v309
    %v311 = vpop.f32.mrb[0].mxu0
    %312 = vdwg.mxu0
    %vm313 = vcmask 7168
    %314 = vst.msk [vmem:[%s6] sm:$0xff] %vm313, %v305
    %315 = vst.msk [vmem:[%s6 + $0x8] sm:$0xff] %vm313, %v310
    // Predicated region
    $region30: #{lam_explainer_head.1} parent=1 // pred_check
      _
    $region31: #{lam_explainer_head.1} parent=1 // pred_check_branch
      %317 = sbr.rel (0) target = $region33
    $region32: #{lam_explainer_head.1} parent=1 // pred_region
      _
    $region33: #{lam_explainer_head.1} parent=1 // pred_fallthru
      _
    // Predicated region
    $region34: #{lam_explainer_head.1} parent=1 // pred_check
      _
    $region35: #{lam_explainer_head.1} parent=1 // pred_check_branch
      %319 = sbr.rel (0) target = $region37
    $region36: #{lam_explainer_head.1} parent=1 // pred_region
      _
    $region37: #{lam_explainer_head.1} parent=1 // pred_fallthru
      _
    %320 = vsyncpa [#allocation3], 1

</llo_original>
